<compile_context>
chip_gen: v6e
topology: v6e:2x2x1
jax: 0.10.0
libtpu: 0.0.40
codegen_flags: <defaults>
</compile_context>

<pallas_src>
import functools

import jax
import jax.numpy as jnp
from jax import lax
from jax.experimental import pallas as pl
from jax.experimental.pallas import tpu as pltpu

LANE = 128


def attention_kernel(x_ref, w_ref, b_ref, bias_ref, o_ref, *, d_pad):
    # x_ref:    (B*S, d_in)
    # w_ref:    (d_in, 3*d_pad)   [Wq*scale | Wk | Wv], each group zero-padded to d_pad
    # b_ref:    (1, 3*d_pad)
    # bias_ref: (B*S, B*S)        0 within a batch, -1e30 across batches
    # o_ref:    (B*S, d_pad)
    x = x_ref[...]

    # Fused QKV projection: one wide MXU matmul + one broadcast bias add.
    qkv = jnp.dot(x, w_ref[...], preferred_element_type=jnp.float32) + b_ref[...]

    # 128-lane-aligned slices -> free views, operands stay lane-dense.
    q = qkv[:, 0 * d_pad:1 * d_pad]          # (B*S, d_pad), scale pre-folded
    k = qkv[:, 1 * d_pad:2 * d_pad]
    v = qkv[:, 2 * d_pad:3 * d_pad]

    # q @ k^T for ALL rows at once (contract last axes; no explicit transpose).
    scores = lax.dot_general(
        q, k,
        dimension_numbers=(((1,), (1,)), ((), ())),
        preferred_element_type=jnp.float32)               # (B*S, B*S)

    # Block-diagonal mask keeps attention within each batch element.
    scores = scores + bias_ref[...]

    # Numerically-stable, exact softmax along the last axis (== F.softmax(dim=2)).
    m = jnp.max(scores, axis=-1, keepdims=True)
    e = jnp.exp(scores - m)
    denom = jnp.sum(e, axis=-1, keepdims=True)
    attn = e / denom

    out = jnp.dot(attn, v, preferred_element_type=jnp.float32)   # (B*S, d_pad)

    # Single lane-dense store (padded columns are exactly zero).
    o_ref[...] = out.astype(o_ref.dtype)


def attention_pallas(x, wq, bq, wk, bk, wv, bv):
    B, S, d_in = x.shape
    d_out = wq.shape[1]
    scale = 1.0 / (d_out ** 0.5)
    d_pad = max(LANE, ((d_out + LANE - 1) // LANE) * LANE)

    def pad_w(w):
        return jnp.pad(w, ((0, 0), (0, d_pad - d_out)))

    def pad_b(b):
        return jnp.pad(b, (0, d_pad - d_out))

    # Host-side fusion: [Wq*scale | Wk | Wv] with each group padded to 128 lanes.
    w_qkv = jnp.concatenate([pad_w(wq * scale), pad_w(wk), pad_w(wv)], axis=1)
    b_qkv = jnp.concatenate([pad_b(bq * scale), pad_b(bk), pad_b(bv)]).reshape(1, 3 * d_pad)

    x2 = x.reshape(B * S, d_in)                            # lane-major flatten

    # Additive block-diagonal mask (0 within batch, -1e30 across batches).
    rows = jnp.arange(B * S) // S
    bias = jnp.where(rows[:, None] == rows[None, :], 0.0, -1e30).astype(jnp.float32)

    kernel = functools.partial(attention_kernel, d_pad=d_pad)

    out_pad = pl.pallas_call(
        kernel,
        out_shape=jax.ShapeDtypeStruct((B * S, d_pad), x.dtype),
        in_specs=[
            pl.BlockSpec(memory_space=pltpu.MemorySpace.VMEM),   # x2
            pl.BlockSpec(memory_space=pltpu.MemorySpace.VMEM),   # w_qkv
            pl.BlockSpec(memory_space=pltpu.MemorySpace.VMEM),   # b_qkv
            pl.BlockSpec(memory_space=pltpu.MemorySpace.VMEM),   # bias mask
        ],
        out_specs=pl.BlockSpec(memory_space=pltpu.MemorySpace.VMEM),
    )(x2, w_qkv, b_qkv, bias)

    return out_pad[:, :d_out].reshape(B, S, d_out)


def attention_ref(x, wq, bq, wk, bk, wv, bv):
    d_out = wq.shape[1]
    hp = jax.lax.Precision.HIGHEST
    q = x @ wq + bq
    k = x @ wk + bk
    v = x @ wv + bv
    scores = jnp.einsum("bqd,bkd->bqk", q, k, precision=hp) / (d_out ** 0.5)
    attn = jax.nn.softmax(scores, axis=-1)
    return jnp.einsum("bqk,bkd->bqd", attn, v, precision=hp)


if __name__ == "__main__":
    B, S, d_in, d_out = 2, 8, 32, 32

    key = jax.random.PRNGKey(0)
    kx, kq, kbq, kk, kbk, kv, kbv = jax.random.split(key, 7)

    x = jax.random.normal(kx, (B, S, d_in), dtype=jnp.float32)
    # Deterministic synthetic parameters (nn.Linear-like scale).
    lim = 1.0 / (d_in ** 0.5)
    wq = jax.random.uniform(kq, (d_in, d_out), jnp.float32, -lim, lim)
    bq = jax.random.uniform(kbq, (d_out,), jnp.float32, -lim, lim)
    wk = jax.random.uniform(kk, (d_in, d_out), jnp.float32, -lim, lim)
    bk = jax.random.uniform(kbk, (d_out,), jnp.float32, -lim, lim)
    wv = jax.random.uniform(kv, (d_in, d_out), jnp.float32, -lim, lim)
    bv = jax.random.uniform(kbv, (d_out,), jnp.float32, -lim, lim)

    out = attention_pallas(x, wq, bq, wk, bk, wv, bv)
    out = jax.block_until_ready(out)

    ref = attention_ref(x, wq, bq, wk, bk, wv, bv)
    assert out.shape == (B, S, d_out)
    assert jnp.allclose(out, ref, atol=1e-3, rtol=1e-3), "mismatch vs reference"

    print("KERNEL_OK")
</pallas_src>

<mosaic_0001>
module attributes {stable_mosaic.version = 11 : i64} {
  func.func @attention_kernel(%arg0: memref<16x32xf32, #tpu.memory_space<vmem>>, %arg1: memref<32x384xf32, #tpu.memory_space<vmem>>, %arg2: memref<1x384xf32, #tpu.memory_space<vmem>>, %arg3: memref<16x16xf32, #tpu.memory_space<vmem>>, %arg4: memref<16x128xf32, #tpu.memory_space<vmem>>) attributes {dimension_semantics = [], scalar_prefetch = 0 : i64, scratch_operands = 0 : i64, tpu.core_type = #tpu.core_type<tc>} {
    %c0 = arith.constant 0 : index
    %c0_0 = arith.constant 0 : index
    %0 = vector.load %arg0[%c0, %c0_0] : memref<16x32xf32, #tpu.memory_space<vmem>>, vector<16x32xf32>
    %c0_1 = arith.constant 0 : index
    %c0_2 = arith.constant 0 : index
    %1 = vector.load %arg1[%c0_1, %c0_2] : memref<32x384xf32, #tpu.memory_space<vmem>>, vector<32x384xf32>
    %cst = arith.constant dense<0.000000e+00> : vector<16x384xf32>
    %2 = tpu.matmul %0, %1, %cst {dimension_numbers = #tpu.dot_dimension_numbers<[1], [0], [0], [1], [0, 0, 1, 1], [], []>} : vector<16x32xf32>, vector<32x384xf32>, vector<16x384xf32> -> vector<16x384xf32>
    %c0_3 = arith.constant 0 : index
    %c0_4 = arith.constant 0 : index
    %3 = vector.load %arg2[%c0_3, %c0_4] : memref<1x384xf32, #tpu.memory_space<vmem>>, vector<1x384xf32>
    %4 = vector.broadcast %3 : vector<1x384xf32> to vector<16x384xf32>
    %5 = arith.addf %2, %4 : vector<16x384xf32>
    %6 = vector.extract_strided_slice %5 {offsets = [0, 0], sizes = [16, 128], strides = [1, 1]} : vector<16x384xf32> to vector<16x128xf32>
    %7 = vector.extract_strided_slice %5 {offsets = [0, 128], sizes = [16, 128], strides = [1, 1]} : vector<16x384xf32> to vector<16x128xf32>
    %8 = vector.extract_strided_slice %5 {offsets = [0, 256], sizes = [16, 128], strides = [1, 1]} : vector<16x384xf32> to vector<16x128xf32>
    %cst_5 = arith.constant dense<0.000000e+00> : vector<16x16xf32>
    %9 = tpu.matmul %6, %7, %cst_5 {dimension_numbers = #tpu.dot_dimension_numbers<[1], [1], [0], [0], [0, 0, 1, 0], [], []>} : vector<16x128xf32>, vector<16x128xf32>, vector<16x16xf32> -> vector<16x16xf32>
    %c0_6 = arith.constant 0 : index
    %c0_7 = arith.constant 0 : index
    %10 = vector.load %arg3[%c0_6, %c0_7] : memref<16x16xf32, #tpu.memory_space<vmem>>, vector<16x16xf32>
    %11 = arith.addf %9, %10 : vector<16x16xf32>
    %cst_8 = arith.constant dense<0xFF800000> : vector<16xf32>
    %12 = vector.multi_reduction <maximumf>, %11, %cst_8 [1] : vector<16x16xf32> to vector<16xf32>
    %13 = vector.shape_cast %12 : vector<16xf32> to vector<16x1xf32>
    %14 = vector.broadcast %13 : vector<16x1xf32> to vector<16x16xf32>
    %15 = arith.subf %11, %14 : vector<16x16xf32>
    %16 = math.exp %15 : vector<16x16xf32>
    %cst_9 = arith.constant dense<0.000000e+00> : vector<16xf32>
    %17 = vector.multi_reduction <add>, %16, %cst_9 [1] : vector<16x16xf32> to vector<16xf32>
    %18 = vector.shape_cast %17 : vector<16xf32> to vector<16x1xf32>
    %19 = vector.broadcast %18 : vector<16x1xf32> to vector<16x16xf32>
    %20 = arith.divf %16, %19 : vector<16x16xf32>
    %cst_10 = arith.constant dense<0.000000e+00> : vector<16x128xf32>
    %21 = tpu.matmul %20, %8, %cst_10 {dimension_numbers = #tpu.dot_dimension_numbers<[1], [0], [0], [1], [0, 0, 1, 1], [], []>} : vector<16x16xf32>, vector<16x128xf32>, vector<16x128xf32> -> vector<16x128xf32>
    %c0_11 = arith.constant 0 : index
    %c0_12 = arith.constant 0 : index
    %22 = vector.load %arg4[%c0_11, %c0_12] : memref<16x128xf32, #tpu.memory_space<vmem>>, vector<16x128xf32>
    tpu.vector_store %arg4[%c0_11, %c0_12], %21 {strides = array<i32>} : memref<16x128xf32, #tpu.memory_space<vmem>>, vector<16x128xf32>,
    return
  }
}

</mosaic_0001>

<llo_original>
// kernel: tpu_custom_call.1
$region0: #{tpu_custom_call.1}
  #allocation0 [shape = 'u32[]', space=smem, size = 0x4, offset = 0x4, fixed_abs, tag = 'smem constant byte address 0x4 - core index']
  #allocation1 [shape = 'u32[144,128]{1,0:T(1,128)}', space=vmem, size = 0x12000, scoped, tag = 'internal scratch']
  %s0 = inlined_call_operand.hbm [shape: f32[16,32], index: 0, kind: input, shape index: {}]
  %s1 = inlined_call_operand.hbm [shape: f32[32,384], index: 1, kind: input, shape index: {}]
  %s2 = inlined_call_operand.vmem [shape: f32[1,384], index: 2, kind: input, shape index: {}]
  %s3 = inlined_call_operand.hbm [shape: f32[16,16], index: 3, kind: input, shape index: {}]
  %s4 = inlined_call_operand.hbm [shape: f32[16,128], index: 4, kind: output, shape index: {}]
  %s5 = sld [smem:[#allocation0]]
  $region38: #{tpu_custom_call.1} parent=0
    _
  %s7 = ssub.s32 1, %s5
  %s8 = scalar_select 0, %s7, %s5
  $region1: #{tpu_custom_call.1} parent=0
    #allocation2 [shape = 'u8[8192]{0}', space=vmem, size = 0x2000, scoped, tag = 'input window, operand 0, single buffered']
    #allocation3 [shape = 's32[1]{0}', space=sflag, size = 0x4, scoped, tag = 'scoped memory for tpu_custom_call.1']
    #allocation4 [shape = 's32[1]{0}', space=sflag, size = 0x4, scoped, tag = 'scoped memory for tpu_custom_call.1']
    #allocation5 [shape = 'u8[49152]{0}', space=vmem, size = 0xc000, scoped, tag = 'input window, operand 1, single buffered']
    #allocation6 [shape = 's32[1]{0}', space=sflag, size = 0x4, scoped, tag = 'scoped memory for tpu_custom_call.1']
    #allocation7 [shape = 'u8[8192]{0}', space=vmem, size = 0x2000, scoped, tag = 'input window, operand 3, single buffered']
    #allocation8 [shape = 'u8[8192]{0}', space=vmem, size = 0x2000, scoped, tag = 'output window, operand 0, single buffered']
    %9 = vsyncpa [#allocation3], 0
    %10 = vsyncpa [#allocation6], 0
    %11 = vsyncpa [#allocation4], 0
    // Predicated region
    $region2: #{tpu_custom_call.1} parent=1 // pred_check
      _
    $region3: #{tpu_custom_call.1} parent=1 // pred_check_branch
      %13 = sbr.rel (0) target = $region5
    $region4: #{tpu_custom_call.1} parent=1 // pred_region
      %s15 = ssub.s32 256, 256
      %16 = vsyncadd [#allocation3], %s15
      %s17 = sshll.u32 [#allocation2], 4
      %s18 = int_to_ptr.vmem [resolvable:$true] %s17
      %23 = dma.hbm_to_vmem [thread:$0]  %s0, 256, %s18, [#allocation3], 128, 128, 8
    $region5: #{tpu_custom_call.1} parent=1 // pred_fallthru
      _
    // Predicated region
    $region6: #{tpu_custom_call.1} parent=1 // pred_check
      _
    $region7: #{tpu_custom_call.1} parent=1 // pred_check_branch
      %25 = sbr.rel (0) target = $region9
    $region8: #{tpu_custom_call.1} parent=1 // pred_region
      %s27 = ssub.s32 1536, 1536
      %28 = vsyncadd [#allocation6], %s27
      %s29 = sshll.u32 [#allocation5], 4
      %s30 = int_to_ptr.vmem [resolvable:$true] %s29
      %35 = dma.hbm_to_vmem [thread:$0]  %s1, 1536, %s30, [#allocation6], 384, 384, 24
    $region9: #{tpu_custom_call.1} parent=1 // pred_fallthru
      _
    // Predicated region
    $region10: #{tpu_custom_call.1} parent=1 // pred_check
      _
    $region11: #{tpu_custom_call.1} parent=1 // pred_check_branch
      %37 = sbr.rel (0) target = $region13
    $region12: #{tpu_custom_call.1} parent=1 // pred_region
      _
    $region13: #{tpu_custom_call.1} parent=1 // pred_fallthru
      _
    // Predicated region
    $region14: #{tpu_custom_call.1} parent=1 // pred_check
      _
    $region15: #{tpu_custom_call.1} parent=1 // pred_check_branch
      %39 = sbr.rel (0) target = $region17
    $region16: #{tpu_custom_call.1} parent=1 // pred_region
      %s41 = ssub.s32 256, 256
      %42 = vsyncadd [#allocation6], %s41
      %s43 = sshll.u32 [#allocation7], 4
      %s44 = int_to_ptr.vmem [resolvable:$true] %s43
      %49 = dma.hbm_to_vmem [thread:$0]  %s3, 256, %s44, [#allocation6], 128, 128, 8
    $region17: #{tpu_custom_call.1} parent=1 // pred_fallthru
      _
    // Predicated region
    $region18: #{tpu_custom_call.1} parent=1 // pred_check
      _
    $region19: #{tpu_custom_call.1} parent=1 // pred_check_branch
      %51 = sbr.rel (0) target = $region21
    $region20: #{tpu_custom_call.1} parent=1 // pred_region
      %52 = dma.done [#allocation3], 256
    $region21: #{tpu_custom_call.1} parent=1 // pred_fallthru
      _
    // Predicated region
    $region22: #{tpu_custom_call.1} parent=1 // pred_check
      _
    $region23: #{tpu_custom_call.1} parent=1 // pred_check_branch
      %54 = sbr.rel (0) target = $region25
    $region24: #{tpu_custom_call.1} parent=1 // pred_region
      %55 = dma.done [#allocation6], 1536
    $region25: #{tpu_custom_call.1} parent=1 // pred_fallthru
      _
    // Predicated region
    $region26: #{tpu_custom_call.1} parent=1 // pred_check
      _
    $region27: #{tpu_custom_call.1} parent=1 // pred_check_branch
      %57 = sbr.rel (0) target = $region29
    $region28: #{tpu_custom_call.1} parent=1 // pred_region
      %58 = dma.done [#allocation6], 256
    $region29: #{tpu_custom_call.1} parent=1 // pred_fallthru
      _
    %v59 = vld [vmem:[#allocation2] sm:$0xff]
    %v60 = vld [vmem:[#allocation2 + $0x8] sm:$0xff]
    %v61 = vld [vmem:[#allocation5] sm:$0xff]
    %v62 = vld [vmem:[#allocation5 + $0x8] sm:$0xff]
    %v63 = vld [vmem:[#allocation5 + $0x10] sm:$0xff]
    %v64 = vld [vmem:[#allocation5 + $0x18] sm:$0xff]
    %v65 = vld [vmem:[#allocation5 + $0x20] sm:$0xff]
    %v66 = vld [vmem:[#allocation5 + $0x28] sm:$0xff]
    %v67 = vld [vmem:[#allocation5 + $0x30] sm:$0xff]
    %v68 = vld [vmem:[#allocation5 + $0x38] sm:$0xff]
    %v69 = vld [vmem:[#allocation5 + $0x40] sm:$0xff]
    %v70 = vld [vmem:[#allocation5 + $0x48] sm:$0xff]
    %v71 = vld [vmem:[#allocation5 + $0x50] sm:$0xff]
    %v72 = vld [vmem:[#allocation5 + $0x58] sm:$0xff]
    %v73 = vld [vmem:[%s2] sm:$0x7]
    %v75 = vlaneseq
    %v76 = vshrl.u32 %v75, 7
    %v77 = vsub.s32 0, %v76
    %v78 = vrot.slane %v73, %v77
    %v79 = vlaneseq
    %v80 = vshrl.u32 %v79, 7
    %v81 = vsub.s32 1, %v80
    %v82 = vrot.slane %v73, %v81
    %v83 = vlaneseq
    %v84 = vshrl.u32 %v83, 7
    %v85 = vsub.s32 2, %v84
    %v86 = vrot.slane %v73, %v85
    %vm90 = vcmask 261120
    %v92 = vsel %vm90, %v59, 0
    %v95 = vsel %vm90, %v60, 0
    %97 = vmatprep.subr.mxu0 0.0
    %98 = vmatpush1.msra.mxu0 0.0
    %99 = vmatprep.subr.mxu0 0.0
    %100 = vmatpush1.msra.mxu0 0.0
    %101 = vmatprep.subr.mxu0 0.0
    %102 = vmatpush1.msra.mxu0 0.0
    %103 = vmatprep.subr.mxu0 0.0
    %104 = vmatpush1.msra.mxu0 0.0
    %105 = vmatprep.subr.mxu0 0.0
    %106 = vmatpush1.msra.mxu0 0.0
    %107 = vmatprep.subr.mxu0 0.0
    %108 = vmatpush1.msra.mxu0 0.0
    %109 = vmatprep.subr.mxu0 0.0
    %110 = vmatpush1.msra.mxu0 0.0
    %111 = vmatprep.subr.mxu0 0.0
    %112 = vmatpush1.msra.mxu0 0.0
    %113 = vmatprep.subr.mxu0 0.0
    %114 = vmatpush1.msra.mxu0 0.0
    %115 = vmatprep.subr.mxu0 0.0
    %116 = vmatpush1.msra.mxu0 0.0
    %117 = vmatprep.subr.mxu0 0.0
    %118 = vmatpush1.msra.mxu0 0.0
    %119 = vmatprep.subr.mxu0 0.0
    %120 = vmatpush1.msra.mxu0 0.0
    %121 = vmatprep.subr.mxu0 %v71
    %122 = vmatpush1.msra.mxu0 %v70
    %123 = vmatprep.subr.mxu0 %v68
    %124 = vmatpush1.msra.mxu0 %v67
    %125 = vmatprep.subr.mxu0 %v65
    %126 = vmatpush1.msra.mxu0 %v64
    %127 = vmatprep.subr.mxu0 %v62
    %128 = vmatpush1.msra.mxu0 %v61
    %129 = vmatprep.subr.mxu0 0.0
    %130 = vmatpush2.msra.mxu0 0.0
    %131 = vmatprep.subr.mxu0 0.0
    %132 = vmatpush2.msra.mxu0 0.0
    %133 = vmatprep.subr.mxu0 0.0
    %134 = vmatpush2.msra.mxu0 0.0
    %135 = vmatprep.subr.mxu0 0.0
    %136 = vmatpush2.msra.mxu0 0.0
    %137 = vmatprep.subr.mxu0 0.0
    %138 = vmatpush2.msra.mxu0 0.0
    %139 = vmatprep.subr.mxu0 0.0
    %140 = vmatpush2.msra.mxu0 0.0
    %141 = vmatprep.subr.mxu0 0.0
    %142 = vmatpush2.msra.mxu0 0.0
    %143 = vmatprep.subr.mxu0 0.0
    %144 = vmatpush2.msra.mxu0 0.0
    %145 = vmatprep.subr.mxu0 0.0
    %146 = vmatpush2.msra.mxu0 0.0
    %147 = vmatprep.subr.mxu0 0.0
    %148 = vmatpush2.msra.mxu0 0.0
    %149 = vmatprep.subr.mxu0 0.0
    %150 = vmatpush2.msra.mxu0 0.0
    %151 = vmatprep.subr.mxu0 0.0
    %152 = vmatpush2.msra.mxu0 0.0
    %153 = vmatprep.subr.mxu0 0.0
    %154 = vmatpush2.msra.mxu0 0.0
    %155 = vmatprep.subr.mxu0 0.0
    %156 = vmatpush2.msra.mxu0 0.0
    %157 = vmatprep.subr.mxu0 0.0
    %158 = vmatpush2.msra.mxu0 0.0
    %159 = vmatprep.subr.mxu0 0.0
    %160 = vmatpush2.msra.mxu0 0.0
    %161 = vmatprep.mubr.f32.mxu0 0.0
    %162 = vmatmul.mubr.f32.gmra.mxu0 %v92
    %v163 = vpop.f32.mrf.mxu0
    %v164 = vadd.f32 %v78, %v163
    %v165 = vpop.f32.mrf.mxu0
    %v166 = vadd.f32 %v82, %v165
    %167 = vmatprep.mubr.f32.mxu0 0.0
    %168 = vmatmul.mubr.f32.gmra.mxu0 %v95
    %v169 = vpop.f32.mrf.mxu0
    %v170 = vadd.f32 %v78, %v169
    %v171 = vpop.f32.mrf.mxu0
    %v172 = vadd.f32 %v82, %v171
    %173 = vdwg.mxu0
    %174 = vmatprep.subr.mxu0 0.0
    %175 = vmatpush1.msra.mxu0 0.0
    %176 = vmatprep.subr.mxu0 0.0
    %177 = vmatpush1.msra.mxu0 0.0
    %178 = vmatprep.subr.mxu0 0.0
    %179 = vmatpush1.msra.mxu0 0.0
    %180 = vmatprep.subr.mxu0 0.0
    %181 = vmatpush1.msra.mxu0 0.0
    %182 = vmatprep.subr.mxu0 0.0
    %183 = vmatpush1.msra.mxu0 0.0
    %184 = vmatprep.subr.mxu0 0.0
    %185 = vmatpush1.msra.mxu0 0.0
    %186 = vmatprep.subr.mxu0 0.0
    %187 = vmatpush1.msra.mxu0 0.0
    %188 = vmatprep.subr.mxu0 0.0
    %189 = vmatpush1.msra.mxu0 0.0
    %190 = vmatprep.subr.mxu0 0.0
    %191 = vmatpush1.msra.mxu0 0.0
    %192 = vmatprep.subr.mxu0 0.0
    %193 = vmatpush1.msra.mxu0 0.0
    %194 = vmatprep.subr.mxu0 0.0
    %195 = vmatpush1.msra.mxu0 0.0
    %196 = vmatprep.subr.mxu0 0.0
    %197 = vmatpush1.msra.mxu0 0.0
    %198 = vmatprep.subr.mxu0 0.0
    %199 = vmatpush1.msra.mxu0 %v72
    %200 = vmatprep.subr.mxu0 0.0
    %201 = vmatpush1.msra.mxu0 %v69
    %202 = vmatprep.subr.mxu0 0.0
    %203 = vmatpush1.msra.mxu0 %v66
    %204 = vmatprep.subr.mxu0 0.0
    %205 = vmatpush1.msra.mxu0 %v63
    %206 = vmatprep.subr.mxu0 0.0
    %207 = vmatpush2.msra.mxu0 0.0
    %208 = vmatprep.subr.mxu0 0.0
    %209 = vmatpush2.msra.mxu0 0.0
    %210 = vmatprep.subr.mxu0 0.0
    %211 = vmatpush2.msra.mxu0 0.0
    %212 = vmatprep.subr.mxu0 0.0
    %213 = vmatpush2.msra.mxu0 0.0
    %214 = vmatprep.subr.mxu0 0.0
    %215 = vmatpush2.msra.mxu0 0.0
    %216 = vmatprep.subr.mxu0 0.0
    %217 = vmatpush2.msra.mxu0 0.0
    %218 = vmatprep.subr.mxu0 0.0
    %219 = vmatpush2.msra.mxu0 0.0
    %220 = vmatprep.subr.mxu0 0.0
    %221 = vmatpush2.msra.mxu0 0.0
    %222 = vmatprep.subr.mxu0 0.0
    %223 = vmatpush2.msra.mxu0 0.0
    %224 = vmatprep.subr.mxu0 0.0
    %225 = vmatpush2.msra.mxu0 0.0
    %226 = vmatprep.subr.mxu0 0.0
    %227 = vmatpush2.msra.mxu0 0.0
    %228 = vmatprep.subr.mxu0 0.0
    %229 = vmatpush2.msra.mxu0 0.0
    %230 = vmatprep.subr.mxu0 0.0
    %231 = vmatpush2.msra.mxu0 0.0
    %232 = vmatprep.subr.mxu0 0.0
    %233 = vmatpush2.msra.mxu0 0.0
    %234 = vmatprep.subr.mxu0 0.0
    %235 = vmatpush2.msra.mxu0 0.0
    %236 = vmatprep.subr.mxu0 0.0
    %237 = vmatpush2.msra.mxu0 0.0
    %238 = vmatprep.mubr.f32.mxu0 0.0
    %239 = vmatmul.mubr.f32.gmra.mxu0 %v92
    %v240 = vpop.f32.mrf.mxu0
    %v241 = vadd.f32 %v86, %v240
    %v242 = vpop.f32.mrf.mxu0
    %243 = vmatprep.mubr.f32.mxu0 0.0
    %244 = vmatmul.mubr.f32.gmra.mxu0 %v95
    %v245 = vpop.f32.mrf.mxu0
    %v246 = vadd.f32 %v86, %v245
    %v247 = vpop.f32.mrf.mxu0
    %248 = vdwg.mxu0
    %v249 = vld [vmem:[#allocation7] sm:$0xff]
    %v250 = vld [vmem:[#allocation7 + $0x8] sm:$0xff]
    %251 = vmatprep.subr.mxu0 0.0
    %252 = vmatpush1.xpose.msra.mxu0 0.0
    %253 = vmatprep.subr.mxu0 0.0
    %254 = vmatpush1.xpose.msra.mxu0 0.0
    %255 = vmatprep.subr.mxu0 0.0
    %256 = vmatpush1.xpose.msra.mxu0 0.0
    %257 = vmatprep.subr.mxu0 0.0
    %258 = vmatpush1.xpose.msra.mxu0 0.0
    %259 = vmatprep.subr.mxu0 0.0
    %260 = vmatpush1.xpose.msra.mxu0 0.0
    %261 = vmatprep.subr.mxu0 0.0
    %262 = vmatpush1.xpose.msra.mxu0 0.0
    %263 = vmatprep.subr.mxu0 0.0
    %264 = vmatpush1.xpose.msra.mxu0 0.0
    %265 = vmatprep.subr.mxu0 0.0
    %266 = vmatpush1.xpose.msra.mxu0 0.0
    %267 = vmatprep.subr.mxu0 0.0
    %268 = vmatpush1.xpose.msra.mxu0 0.0
    %269 = vmatprep.subr.mxu0 0.0
    %270 = vmatpush1.xpose.msra.mxu0 0.0
    %271 = vmatprep.subr.mxu0 0.0
    %272 = vmatpush1.xpose.msra.mxu0 0.0
    %273 = vmatprep.subr.mxu0 0.0
    %274 = vmatpush1.xpose.msra.mxu0 0.0
    %275 = vmatprep.subr.mxu0 0.0
    %276 = vmatpush1.xpose.msra.mxu0 0.0
    %277 = vmatprep.subr.mxu0 0.0
    %278 = vmatpush1.xpose.msra.mxu0 0.0
    %279 = vmatprep.subr.mxu0 0.0
    %280 = vmatpush1.xpose.msra.mxu0 %v172
    %281 = vmatprep.subr.mxu0 0.0
    %282 = vmatpush1.xpose.msra.mxu0 %v166
    %283 = vmatprep.subr.mxu0 0.0
    %284 = vmatpush2.xpose.msra.mxu0 0.0
    %285 = vmatprep.subr.mxu0 0.0
    %286 = vmatpush2.xpose.msra.mxu0 0.0
    %287 = vmatprep.subr.mxu0 0.0
    %288 = vmatpush2.xpose.msra.mxu0 0.0
    %289 = vmatprep.subr.mxu0 0.0
    %290 = vmatpush2.xpose.msra.mxu0 0.0
    %291 = vmatprep.subr.mxu0 0.0
    %292 = vmatpush2.xpose.msra.mxu0 0.0
    %293 = vmatprep.subr.mxu0 0.0
    %294 = vmatpush2.xpose.msra.mxu0 0.0
    %295 = vmatprep.subr.mxu0 0.0
    %296 = vmatpush2.xpose.msra.mxu0 0.0
    %297 = vmatprep.subr.mxu0 0.0
    %298 = vmatpush2.xpose.msra.mxu0 0.0
    %299 = vmatprep.subr.mxu0 0.0
    %300 = vmatpush2.xpose.msra.mxu0 0.0
    %301 = vmatprep.subr.mxu0 0.0
    %302 = vmatpush2.xpose.msra.mxu0 0.0
    %303 = vmatprep.subr.mxu0 0.0
    %304 = vmatpush2.xpose.msra.mxu0 0.0
    %305 = vmatprep.subr.mxu0 0.0
    %306 = vmatpush2.xpose.msra.mxu0 0.0
    %307 = vmatprep.subr.mxu0 0.0
    %308 = vmatpush2.xpose.msra.mxu0 0.0
    %309 = vmatprep.subr.mxu0 0.0
    %310 = vmatpush2.xpose.msra.mxu0 0.0
    %311 = vmatprep.subr.mxu0 0.0
    %312 = vmatpush2.xpose.msra.mxu0 0.0
    %313 = vmatprep.subr.mxu0 0.0
    %314 = vmatpush2.xpose.msra.mxu0 0.0
    %315 = vmatprep.mubr.f32.mxu0 0.0
    %316 = vmatmul.mubr.f32.gmra.mxu0 %v164
    %v317 = vpop.f32.mrf.mxu0
    %v318 = vadd.f32 %v249, %v317
    %v319 = vpop.f32.mrf.mxu0
    %320 = vmatprep.mubr.f32.mxu0 0.0
    %321 = vmatmul.mubr.f32.gmra.mxu0 %v170
    %v322 = vpop.f32.mrf.mxu0
    %v323 = vadd.f32 %v250, %v322
    %v324 = vpop.f32.mrf.mxu0
    %325 = vdwg.mxu0
    %vm326 = vcmask 130048
    %v327 = vsel %vm326, %v318, -inf
    %328 = vmax.xlane.f32.xlu0 %v327
    %v329 = vpop.xlane.xlu0 %328
    %v330 = vsel %vm326, %v323, -inf
    %331 = vmax.xlane.f32.xlu0 %v330
    %v332 = vpop.xlane.xlu0 %331
    %v333 = vsub.f32 %v318, %v329
    %v334 = vsub.f32 %v323, %v332
    %v335 = vmul.f32 %v333, 1.442695
    %v336 = vpow.pop %v335
    %v337 = vmul.f32 %v334, 1.442695
    %v338 = vpow.pop %v337
    %v339 = vsel %vm326, %v336, 0.0
    %340 = vadd.xlane.f32.xlu0 %v339
    %v341 = vpop.xlane.xlu0 %340
    %v342 = vsel %vm326, %v338, 0.0
    %343 = vadd.xlane.f32.xlu0 %v342
    %v344 = vpop.xlane.xlu0 %343
    %v345 = vrcp.pop %v341
    %v346 = vmul.f32 %v336, %v345
    %v347 = vrcp.pop %v344
    %v348 = vmul.f32 %v338, %v347
    %v350 = vsel %vm326, %v346, 0
    %v353 = vsel %vm326, %v348, 0
    %355 = vmatprep.subr.mxu0 0.0
    %356 = vmatpush1.msra.mxu0 0.0
    %357 = vmatprep.subr.mxu0 0.0
    %358 = vmatpush1.msra.mxu0 0.0
    %359 = vmatprep.subr.mxu0 0.0
    %360 = vmatpush1.msra.mxu0 0.0
    %361 = vmatprep.subr.mxu0 0.0
    %362 = vmatpush1.msra.mxu0 0.0
    %363 = vmatprep.subr.mxu0 0.0
    %364 = vmatpush1.msra.mxu0 0.0
    %365 = vmatprep.subr.mxu0 0.0
    %366 = vmatpush1.msra.mxu0 0.0
    %367 = vmatprep.subr.mxu0 0.0
    %368 = vmatpush1.msra.mxu0 0.0
    %369 = vmatprep.subr.mxu0 0.0
    %370 = vmatpush1.msra.mxu0 0.0
    %371 = vmatprep.subr.mxu0 0.0
    %372 = vmatpush1.msra.mxu0 0.0
    %373 = vmatprep.subr.mxu0 0.0
    %374 = vmatpush1.msra.mxu0 0.0
    %375 = vmatprep.subr.mxu0 0.0
    %376 = vmatpush1.msra.mxu0 0.0
    %377 = vmatprep.subr.mxu0 0.0
    %378 = vmatpush1.msra.mxu0 0.0
    %379 = vmatprep.subr.mxu0 0.0
    %380 = vmatpush1.msra.mxu0 0.0
    %381 = vmatprep.subr.mxu0 0.0
    %382 = vmatpush1.msra.mxu0 0.0
    %383 = vmatprep.subr.mxu0 0.0
    %384 = vmatpush1.msra.mxu0 %v246
    %385 = vmatprep.subr.mxu0 0.0
    %386 = vmatpush1.msra.mxu0 %v241
    %387 = vmatprep.subr.mxu0 0.0
    %388 = vmatpush2.msra.mxu0 0.0
    %389 = vmatprep.subr.mxu0 0.0
    %390 = vmatpush2.msra.mxu0 0.0
    %391 = vmatprep.subr.mxu0 0.0
    %392 = vmatpush2.msra.mxu0 0.0
    %393 = vmatprep.subr.mxu0 0.0
    %394 = vmatpush2.msra.mxu0 0.0
    %395 = vmatprep.subr.mxu0 0.0
    %396 = vmatpush2.msra.mxu0 0.0
    %397 = vmatprep.subr.mxu0 0.0
    %398 = vmatpush2.msra.mxu0 0.0
    %399 = vmatprep.subr.mxu0 0.0
    %400 = vmatpush2.msra.mxu0 0.0
    %401 = vmatprep.subr.mxu0 0.0
    %402 = vmatpush2.msra.mxu0 0.0
    %403 = vmatprep.subr.mxu0 0.0
    %404 = vmatpush2.msra.mxu0 0.0
    %405 = vmatprep.subr.mxu0 0.0
    %406 = vmatpush2.msra.mxu0 0.0
    %407 = vmatprep.subr.mxu0 0.0
    %408 = vmatpush2.msra.mxu0 0.0
    %409 = vmatprep.subr.mxu0 0.0
    %410 = vmatpush2.msra.mxu0 0.0
    %411 = vmatprep.subr.mxu0 0.0
    %412 = vmatpush2.msra.mxu0 0.0
    %413 = vmatprep.subr.mxu0 0.0
    %414 = vmatpush2.msra.mxu0 0.0
    %415 = vmatprep.subr.mxu0 0.0
    %416 = vmatpush2.msra.mxu0 0.0
    %417 = vmatprep.subr.mxu0 0.0
    %418 = vmatpush2.msra.mxu0 0.0
    %419 = vmatprep.mubr.f32.mxu0 0.0
    %420 = vmatmul.mubr.f32.gmra.mxu0 %v350
    %v421 = vpop.f32.mrf.mxu0
    %v422 = vadd.f32 0.0, %v421
    %v423 = vpop.f32.mrf.mxu0
    %424 = vmatprep.mubr.f32.mxu0 0.0
    %425 = vmatmul.mubr.f32.gmra.mxu0 %v353
    %v426 = vpop.f32.mrf.mxu0
    %v427 = vadd.f32 0.0, %v426
    %v428 = vpop.f32.mrf.mxu0
    %429 = vdwg.mxu0
    %430 = vst [vmem:[#allocation8] sm:$0xff] %v422
    %431 = vst [vmem:[#allocation8 + $0x8] sm:$0xff] %v427
    // Predicated region
    $region30: #{tpu_custom_call.1} parent=1 // pred_check
      _
    $region31: #{tpu_custom_call.1} parent=1 // pred_check_branch
      %433 = sbr.rel (0) target = $region33
    $region32: #{tpu_custom_call.1} parent=1 // pred_region
      %s435 = ssub.s32 256, 256
      %436 = vsyncadd [#allocation4], %s435
      %s437 = sshll.u32 [#allocation8], 4
      %s438 = int_to_ptr.vmem [resolvable:$true] %s437
      %443 = dma.vmem_to_hbm [thread:$0]  %s438, 256, %s4, [#allocation4], 128, 128, 8
    $region33: #{tpu_custom_call.1} parent=1 // pred_fallthru
      _
    // Predicated region
    $region34: #{tpu_custom_call.1} parent=1 // pred_check
      _
    $region35: #{tpu_custom_call.1} parent=1 // pred_check_branch
      %445 = sbr.rel (0) target = $region37
    $region36: #{tpu_custom_call.1} parent=1 // pred_region
      %446 = dma.done [#allocation4], 256
    $region37: #{tpu_custom_call.1} parent=1 // pred_fallthru
      _
    %447 = vsyncpa [#allocation3], 1
    %448 = vsyncpa [#allocation6], 1
    %449 = vsyncpa [#allocation4], 1

</llo_original>
